<compile_context>
chip_gen: v5e
topology: v5e:2x2
jax: 0.10.0
libtpu: 0.0.40
codegen_flags: <defaults>
</compile_context>

<pallas_src>
import functools

import jax
import jax.numpy as jnp
from jax import lax
from jax.experimental import pallas as pl
from jax.experimental.pallas import tpu as pltpu


def _decoder_kernel(patch_ref, chat_ref, pp_ref, gamma_ref, beta_ref, out_ref,
                    *, eps, sim_dtype):
    # patch_ref: (1, TILE_N, D)  patch tokens, native dtype
    # chat_ref:  (1, C, D)       pre-projected + L2-normalized class queries
    # pp_ref:    (D, D)          proj_patch, native dtype
    # gamma_ref: (C, 1) f32      LayerNorm weight
    # beta_ref:  (C, 1) f32      LayerNorm bias
    # out_ref:   (1, C, TILE_N)  lane-dense transposed masks (f32)
    patches = patch_ref[0]                                        # (TILE_N, D)
    c_hat = chat_ref[0]                                           # (C, D)

    # Patch projection on the MXU with f32 accumulation.
    p = jnp.dot(patches, pp_ref[...],
                preferred_element_type=jnp.float32)               # (TILE_N, D)

    # L2 normalize rows (rsqrt -> EUP slot, not a VPU divide); fold the
    # normalization into the sim_dtype cast feeding the similarity matmul.
    inv_p = lax.rsqrt(jnp.sum(p * p, axis=-1, keepdims=True))     # (TILE_N, 1)
    p_hat = (p * inv_p).astype(sim_dtype)                         # (TILE_N, D)

    # Similarity, produced directly in transposed (C, TILE_N) layout by
    # contracting the last (feature) dims of both operands -- no explicit
    # transpose of the large p operand is materialized.
    masks = lax.dot_general(c_hat, p_hat,
                            dimension_numbers=(((1,), (1,)), ((), ())),
                            preferred_element_type=jnp.float32)   # (C, TILE_N)

    # LayerNorm over the class axis (axis 0 in this layout), single-pass
    # statistics (biased variance, matching nn.LayerNorm).
    inv_c = 1.0 / masks.shape[0]
    mean = jnp.sum(masks, axis=0, keepdims=True) * inv_c          # (1, TILE_N)
    mean_sq = jnp.sum(masks * masks, axis=0, keepdims=True) * inv_c
    var = mean_sq - mean * mean
    masks = (masks - mean) * lax.rsqrt(var + eps)
    masks = masks * gamma_ref[...] + beta_ref[...]                # (C,1) bcast

    out_ref[0] = masks.astype(out_ref.dtype)


def _tpu_vmem_capacity_bytes():
    """Best-effort VMEM capacity query; conservative (v7x) fallback."""
    try:
        info = pltpu.get_tpu_info()
        cap = getattr(info, "vmem_capacity_bytes", None)
        if cap:
            return int(cap)
    except Exception:
        pass
    return 64 * 1024 * 1024


def segmenter_style_decoder(x, proj_patch, proj_classes, ln_gamma, ln_beta,
                            im_size, patch_size, n_cls,
                            sim_dtype=jnp.bfloat16):
    B, S, D = x.shape
    H, W = im_size
    GS = H // patch_size
    N = S - 1 - n_cls
    assert N == GS * GS, "token count must match (H/patch)^2"

    # Token split; the patch slab starts at an (8,128)-aligned offset and the
    # unused [CLS] row is never DMA'd by the kernel.
    # TODO(synk): have the encoder hand over patch / class-query tokens as
    # separate arrays (or verify in HLO that these slices fuse) to avoid a
    # possible extra HBM pass over the token tensor on v6e.
    patches = x[:, 1:1 + N]                                        # (B, N, D)
    cls_tok = x[:, 1 + N:]                                         # (B, C, D)

    # Class path precomputed in plain XLA (tiny B*C*D*D matmul), f32 math,
    # cast once to the similarity dtype consumed by the kernel.
    c = jnp.einsum("bcd,de->bce", cls_tok, proj_classes,
                   preferred_element_type=jnp.float32)
    c_hat = (c * lax.rsqrt(jnp.sum(c * c, axis=-1, keepdims=True))
             ).astype(sim_dtype)                                   # (B, C, D)

    # LN params as (C, 1) columns so they broadcast over the lane (N) axis of
    # the transposed (C, TILE_N) masks tile.
    gamma = ln_gamma.reshape(n_cls, 1).astype(jnp.float32)
    beta = ln_beta.reshape(n_cls, 1).astype(jnp.float32)

    # ---- generation-aware tiling & VMEM budget ----
    vmem_cap = _tpu_vmem_capacity_bytes()
    tile_n_max = 1024 if vmem_cap >= 100 * 1024 * 1024 else 512    # v5e/v6e vs v7x
    tile_n = N if N <= tile_n_max else tile_n_max                  # multiple of 128 when tiled
    n_tiles = pl.cdiv(N, tile_n)

    itm = x.dtype.itemsize
    sim_itm = jnp.dtype(sim_dtype).itemsize
    per_step = (2 * tile_n * D * itm                       # patch block (double-buffered)
                + 2 * n_cls * D * sim_itm                  # c_hat block (double-buffered)
                + 1 * D * D * proj_patch.dtype.itemsize    # weights (single-buffered)
                + 2 * n_cls * tile_n * 4                   # output block (double-buffered)
                + 4 * (tile_n * D + n_cls * tile_n) * 4)   # f32 intermediates + slack
    vmem_limit = int(min(max(2 * per_step, 32 * 1024 * 1024),
                         (3 * vmem_cap) // 4))

    # Advisory cost estimate for XLA scheduling around the custom call.
    flops = 2 * B * (N * D * D + n_cls * N * D)
    bytes_accessed = (B * N * D * itm + B * n_cls * D * sim_itm
                      + D * D * proj_patch.dtype.itemsize + B * n_cls * N * 4)
    cost = pl.CostEstimate(flops=int(flops), transcendentals=int(2 * B * N),
                           bytes_accessed=int(bytes_accessed))

    kernel = functools.partial(_decoder_kernel, eps=1e-5, sim_dtype=sim_dtype)
    const_mode = pl.Buffered(1)   # constant-index blocks: fetch once, one buffer

    out = pl.pallas_call(
        kernel,
        out_shape=jax.ShapeDtypeStruct((B, n_cls, N), jnp.float32),
        grid=(B, n_tiles),
        in_specs=[
            pl.BlockSpec((1, tile_n, D), lambda b, j: (b, j, 0)),   # patch tokens
            pl.BlockSpec((1, n_cls, D), lambda b, j: (b, 0, 0)),    # normalized class queries
            pl.BlockSpec((D, D), lambda b, j: (0, 0),
                         pipeline_mode=const_mode),                 # proj_patch
            pl.BlockSpec((n_cls, 1), lambda b, j: (0, 0),
                         pipeline_mode=const_mode),                 # ln gamma
            pl.BlockSpec((n_cls, 1), lambda b, j: (0, 0),
                         pipeline_mode=const_mode),                 # ln beta
        ],
        out_specs=pl.BlockSpec((1, n_cls, tile_n), lambda b, j: (b, 0, j)),
        compiler_params=pltpu.CompilerParams(
            dimension_semantics=("parallel", "parallel"),
            vmem_limit_bytes=vmem_limit),
        cost_estimate=cost,
    )(patches, c_hat, proj_patch, gamma, beta)

    # Lane-dense (B, C, N) -> (B, C, GS, GS): pure reshape, no transpose pass
    # (matches einops 'b (h w) n -> b n h w').
    return out.reshape(B, n_cls, GS, GS)


def _reference(x, proj_patch, proj_classes, ln_gamma, ln_beta,
               im_size, patch_size, n_cls):
    # Pure-JAX reference mirroring the PyTorch forward.
    H, W = im_size
    GS = H // patch_size
    patches = x[:, 1:-n_cls]
    cls_tok = x[:, -n_cls:]
    patches = patches @ proj_patch
    cls_tok = cls_tok @ proj_classes
    patches = patches / jnp.linalg.norm(patches, axis=-1, keepdims=True)
    cls_tok = cls_tok / jnp.linalg.norm(cls_tok, axis=-1, keepdims=True)
    masks = patches @ jnp.swapaxes(cls_tok, 1, 2)
    mean = jnp.mean(masks, axis=-1, keepdims=True)
    var = jnp.mean((masks - mean) ** 2, axis=-1, keepdims=True)
    masks = (masks - mean) / jnp.sqrt(var + 1e-5) * ln_gamma + ln_beta
    B = x.shape[0]
    return masks.reshape(B, GS, GS, n_cls).transpose(0, 3, 1, 2)


if __name__ == "__main__":
    # Small, module-consistent shapes.
    patch_size = 4
    d_model = 32
    num_classes = 8
    B = 2
    H = W = 16
    GS = H // patch_size                 # 4
    N = GS * GS                          # 16 patch tokens
    S = 1 + N + num_classes              # 25 tokens total

    key = jax.random.PRNGKey(0)
    kx, kp, kc, kg, kb = jax.random.split(key, 5)

    x = jax.random.normal(kx, (B, S, d_model), dtype=jnp.float32)
    proj_patch = jax.random.normal(kp, (d_model, d_model), dtype=jnp.float32)
    proj_classes = jax.random.normal(kc, (d_model, d_model), dtype=jnp.float32)
    ln_gamma = 1.0 + 0.1 * jax.random.normal(kg, (num_classes,), jnp.float32)
    ln_beta = 0.1 * jax.random.normal(kb, (num_classes,), jnp.float32)

    ref = _reference(x, proj_patch, proj_classes, ln_gamma, ln_beta,
                     (H, W), patch_size, num_classes)

    # Structural-correctness check: f32 similarity operands, tight tolerance.
    out_f32 = segmenter_style_decoder(x, proj_patch, proj_classes, ln_gamma,
                                      ln_beta, (H, W), patch_size, num_classes,
                                      sim_dtype=jnp.float32)
    out_f32 = jax.block_until_ready(out_f32)
    assert out_f32.shape == (B, num_classes, GS, GS)
    assert jnp.allclose(out_f32, ref, atol=1e-4, rtol=1e-4)

    # Production / perf path: bf16 similarity operands with f32 accumulation
    # (error after the LayerNorm is dominated by bf16 operand rounding).
    out_bf = segmenter_style_decoder(x, proj_patch, proj_classes, ln_gamma,
                                     ln_beta, (H, W), patch_size, num_classes)
    out_bf = jax.block_until_ready(out_bf)
    assert out_bf.shape == (B, num_classes, GS, GS)
    assert bool(jnp.all(jnp.isfinite(out_bf)))
    assert jnp.allclose(out_bf, ref, atol=1e-1, rtol=1e-1)

    print("KERNEL_OK")
</pallas_src>

<mosaic_0001>
module attributes {stable_mosaic.version = 11 : i64} {
  func.func @_decoder_kernel(%arg0: i32, %arg1: i32, %arg2: memref<1x16x32xf32, #tpu.memory_space<vmem>>, %arg3: memref<1x8x32xf32, #tpu.memory_space<vmem>>, %arg4: memref<32x32xf32, #tpu.memory_space<vmem>>, %arg5: memref<8x1xf32, #tpu.memory_space<vmem>>, %arg6: memref<8x1xf32, #tpu.memory_space<vmem>>, %arg7: memref<1x8x16xf32, #tpu.memory_space<vmem>>) attributes {dimension_semantics = [#tpu.dimension_semantics<parallel>, #tpu.dimension_semantics<parallel>], iteration_bounds = array<i64: 2, 1>, scalar_prefetch = 0 : i64, scratch_operands = 0 : i64, tpu.core_type = #tpu.core_type<tc>, window_params = [{transform_indices = @transform_0, window_bounds = array<i64: 1, 16, 32>}, {transform_indices = @transform_1, window_bounds = array<i64: 1, 8, 32>}, {pipeline_mode = #tpu.pipeline_mode<synchronous>, transform_indices = @transform_2, window_bounds = array<i64: 32, 32>}, {pipeline_mode = #tpu.pipeline_mode<synchronous>, transform_indices = @transform_3, window_bounds = array<i64: 8, 1>}, {pipeline_mode = #tpu.pipeline_mode<synchronous>, transform_indices = @transform_4, window_bounds = array<i64: 8, 1>}, {transform_indices = @transform_5, window_bounds = array<i64: 1, 8, 16>}]} {
    %c0 = arith.constant 0 : index
    %c0_0 = arith.constant 0 : index
    %c0_1 = arith.constant 0 : index
    %0 = vector.load %arg2[%c0, %c0_0, %c0_1] : memref<1x16x32xf32, #tpu.memory_space<vmem>>, vector<1x16x32xf32>
    %1 = vector.shape_cast %0 : vector<1x16x32xf32> to vector<16x32xf32>
    %c0_2 = arith.constant 0 : index
    %c0_3 = arith.constant 0 : index
    %c0_4 = arith.constant 0 : index
    %2 = vector.load %arg3[%c0_2, %c0_3, %c0_4] : memref<1x8x32xf32, #tpu.memory_space<vmem>>, vector<1x8x32xf32>
    %3 = vector.shape_cast %2 : vector<1x8x32xf32> to vector<8x32xf32>
    %c0_5 = arith.constant 0 : index
    %c0_6 = arith.constant 0 : index
    %4 = vector.load %arg4[%c0_5, %c0_6] : memref<32x32xf32, #tpu.memory_space<vmem>>, vector<32x32xf32>
    %cst = arith.constant dense<0.000000e+00> : vector<16x32xf32>
    %5 = tpu.matmul %1, %4, %cst {dimension_numbers = #tpu.dot_dimension_numbers<[1], [0], [0], [1], [0, 0, 1, 1], [], []>} : vector<16x32xf32>, vector<32x32xf32>, vector<16x32xf32> -> vector<16x32xf32>
    %6 = arith.mulf %5, %5 : vector<16x32xf32>
    %cst_7 = arith.constant dense<0.000000e+00> : vector<16xf32>
    %7 = vector.multi_reduction <add>, %6, %cst_7 [1] : vector<16x32xf32> to vector<16xf32>
    %8 = vector.shape_cast %7 : vector<16xf32> to vector<16x1xf32>
    %9 = math.rsqrt %8 : vector<16x1xf32>
    %10 = vector.broadcast %9 : vector<16x1xf32> to vector<16x32xf32>
    %11 = arith.mulf %5, %10 : vector<16x32xf32>
    %cst_8 = arith.constant dense<0.000000e+00> : vector<8x16xf32>
    %12 = tpu.matmul %3, %11, %cst_8 {dimension_numbers = #tpu.dot_dimension_numbers<[1], [1], [0], [0], [0, 0, 1, 0], [], []>} : vector<8x32xf32>, vector<16x32xf32>, vector<8x16xf32> -> vector<8x16xf32>
    %cst_9 = arith.constant dense<0.000000e+00> : vector<16xf32>
    %13 = vector.multi_reduction <add>, %12, %cst_9 [0] : vector<8x16xf32> to vector<16xf32>
    %14 = vector.shape_cast %13 : vector<16xf32> to vector<1x16xf32>
    %cst_10 = arith.constant 1.250000e-01 : f32
    %15 = vector.broadcast %cst_10 : f32 to vector<1x16xf32>
    %16 = arith.mulf %14, %15 : vector<1x16xf32>
    %17 = arith.mulf %12, %12 : vector<8x16xf32>
    %cst_11 = arith.constant dense<0.000000e+00> : vector<16xf32>
    %18 = vector.multi_reduction <add>, %17, %cst_11 [0] : vector<8x16xf32> to vector<16xf32>
    %19 = vector.shape_cast %18 : vector<16xf32> to vector<1x16xf32>
    %cst_12 = arith.constant 1.250000e-01 : f32
    %20 = vector.broadcast %cst_12 : f32 to vector<1x16xf32>
    %21 = arith.mulf %19, %20 : vector<1x16xf32>
    %22 = arith.mulf %16, %16 : vector<1x16xf32>
    %23 = arith.subf %21, %22 : vector<1x16xf32>
    %24 = vector.broadcast %16 : vector<1x16xf32> to vector<8x16xf32>
    %25 = arith.subf %12, %24 : vector<8x16xf32>
    %cst_13 = arith.constant 9.99999974E-6 : f32
    %26 = vector.broadcast %cst_13 : f32 to vector<1x16xf32>
    %27 = arith.addf %23, %26 : vector<1x16xf32>
    %28 = math.rsqrt %27 : vector<1x16xf32>
    %29 = vector.broadcast %28 : vector<1x16xf32> to vector<8x16xf32>
    %30 = arith.mulf %25, %29 : vector<8x16xf32>
    %c0_14 = arith.constant 0 : index
    %c0_15 = arith.constant 0 : index
    %31 = vector.load %arg5[%c0_14, %c0_15] : memref<8x1xf32, #tpu.memory_space<vmem>>, vector<8x1xf32>
    %32 = vector.broadcast %31 : vector<8x1xf32> to vector<8x16xf32>
    %33 = arith.mulf %30, %32 : vector<8x16xf32>
    %c0_16 = arith.constant 0 : index
    %c0_17 = arith.constant 0 : index
    %34 = vector.load %arg6[%c0_16, %c0_17] : memref<8x1xf32, #tpu.memory_space<vmem>>, vector<8x1xf32>
    %35 = vector.broadcast %34 : vector<8x1xf32> to vector<8x16xf32>
    %36 = arith.addf %33, %35 : vector<8x16xf32>
    %c0_18 = arith.constant 0 : index
    %c0_19 = arith.constant 0 : index
    %c0_20 = arith.constant 0 : index
    %37 = vector.load %arg7[%c0_18, %c0_19, %c0_20] : memref<1x8x16xf32, #tpu.memory_space<vmem>>, vector<1x8x16xf32>
    %38 = vector.shape_cast %37 : vector<1x8x16xf32> to vector<8x16xf32>
    %39 = vector.shape_cast %36 : vector<8x16xf32> to vector<1x8x16xf32>
    tpu.vector_store %arg7[%c0_18, %c0_19, %c0_20], %39 {strides = array<i32>} : memref<1x8x16xf32, #tpu.memory_space<vmem>>, vector<1x8x16xf32>,
    return
  }
  func.func @transform_0(%arg0: i32, %arg1: i32) -> (i32, i32, i32) {
    %c0_i32 = arith.constant 0 : i32
    %c0_i32_0 = arith.constant 0 : i32
    return %arg0, %arg1, %c0_i32 : i32, i32, i32
  }
  func.func @transform_1(%arg0: i32, %arg1: i32) -> (i32, i32, i32) {
    %c0_i32 = arith.constant 0 : i32
    %c0_i32_0 = arith.constant 0 : i32
    %c0_i32_1 = arith.constant 0 : i32
    return %arg0, %c0_i32, %c0_i32_0 : i32, i32, i32
  }
  func.func @transform_2(%arg0: i32, %arg1: i32) -> (i32, i32) {
    %c0_i32 = arith.constant 0 : i32
    %c0_i32_0 = arith.constant 0 : i32
    %c0_i32_1 = arith.constant 0 : i32
    return %c0_i32, %c0_i32_0 : i32, i32
  }
  func.func @transform_3(%arg0: i32, %arg1: i32) -> (i32, i32) {
    %c0_i32 = arith.constant 0 : i32
    %c0_i32_0 = arith.constant 0 : i32
    %c0_i32_1 = arith.constant 0 : i32
    return %c0_i32, %c0_i32_0 : i32, i32
  }
  func.func @transform_4(%arg0: i32, %arg1: i32) -> (i32, i32) {
    %c0_i32 = arith.constant 0 : i32
    %c0_i32_0 = arith.constant 0 : i32
    %c0_i32_1 = arith.constant 0 : i32
    return %c0_i32, %c0_i32_0 : i32, i32
  }
  func.func @transform_5(%arg0: i32, %arg1: i32) -> (i32, i32, i32) {
    %c0_i32 = arith.constant 0 : i32
    %c0_i32_0 = arith.constant 0 : i32
    return %arg0, %c0_i32, %arg1 : i32, i32, i32
  }
}

</mosaic_0001>

<llo_original>
// kernel: tpu_custom_call.1
$region0: #{tpu_custom_call.1}
  #allocation0 [shape = 'u32[]', space=smem, size = 0x4, offset = 0x4, fixed_abs, tag = 'smem constant byte address 0x4 - core index']
  #allocation1 [shape = 'u32[72,128]{1,0:T(1,128)}', space=vmem, size = 0x9000, scoped, tag = 'internal scratch']
  %s0 = inlined_call_operand.hbm [shape: f32[2,16,32], index: 0, kind: input, shape index: {}]
  %s1 = inlined_call_operand.vmem [shape: f32[2,8,32], index: 1, kind: input, shape index: {}]
  %s2 = inlined_call_operand.hbm [shape: f32[32,32], index: 2, kind: input, shape index: {}]
  %s3 = inlined_call_operand.vmem [shape: f32[8,1], index: 3, kind: input, shape index: {}]
  %s4 = inlined_call_operand.vmem [shape: f32[8,1], index: 4, kind: input, shape index: {}]
  %s5 = inlined_call_operand.hbm [shape: f32[2,8,16], index: 5, kind: output, shape index: {}]
  %s6 = sld [smem:[#allocation0]]
  $region61: #{tpu_custom_call.1} parent=0
    _
  %s8 = ssub.s32 1, %s6
  %s9 = scalar_select 0, %s8, %s6
  $region1: #{tpu_custom_call.1} parent=0
    #allocation2 [shape = 'u8[16384]{0}', space=vmem, size = 0x4000, scoped, tag = 'input window, operand 0']
    #allocation3 [shape = 's32[2]{0}', space=sflag, size = 0x8, scoped, tag = 'scoped memory for tpu_custom_call.1']
    #allocation4 [shape = 's32[2]{0}', space=sflag, size = 0x8, scoped, tag = 'scoped memory for tpu_custom_call.1']
    #allocation5 [shape = 'u8[16384]{0}', space=vmem, size = 0x4000, scoped, tag = 'input window, operand 2, single buffered']
    #allocation6 [shape = 's32[1]{0}', space=sflag, size = 0x4, scoped, tag = 'scoped memory for tpu_custom_call.1']
    #allocation7 [shape = 'u8[8192]{0}', space=vmem, size = 0x2000, scoped, tag = 'output window, operand 0']
    %10 = vsyncpa [#allocation3], 0
    %s11 = scalar_lea.sflag [#allocation3], 1
    %12 = vsyncpa %s11, 0
    %13 = vsyncpa [#allocation6], 0
    %14 = vsyncpa [#allocation4], 0
    %s15 = scalar_lea.sflag [#allocation4], 1
    %16 = vsyncpa %s15, 0
    loop: start=0, step=1, limit=4
    $region2: #{tpu_custom_call.1} parent=1 // loop_pre_header
      _
    $region3: #{tpu_custom_call.1} parent=1 // loop_header
      %s18 = sphi 0, %s22
      %p19 = scmp.ge.s32.totalorder %s18, 4
      %s25 = sphi 0, %s37
      %s26 = sphi 0, %s33
      %s27 = sphi 0, %s25
      %s28 = sphi 0, %s26
      %s29 = sphi 0, %s27
      %s30 = sphi 0, %s28
      %s42 = sphi 0, %s44
      %s45 = sphi 0, %s42
      %s46 = sphi 0, %s45
      %s62 = sphi 0, %s46
      %s68 = sphi 0, %s70
      %s71 = sphi 0, %s68
      %s72 = sphi 0, %s71
      %s88 = sphi 0, %s72
      %s92 = sphi 0, %s92
      %s94 = sphi 0, %s92
      %s95 = sphi 0, %s94
      %s109 = sphi 0, %s95
      %s113 = sphi 0, %s113
      %s115 = sphi 0, %s113
      %s116 = sphi 0, %s115
      %s130 = sphi 0, %s116
      %s134 = sphi 0, %s134
      %s136 = sphi 0, %s134
      %s137 = sphi 0, %s136
      %s151 = sphi 0, %s137
      %s159 = sphi 0, %s161
      %s162 = sphi 0, %s159
      %s163 = sphi 0, %s162
      %s179 = sphi 0, %s163
    $region4: #{tpu_custom_call.1} parent=1 // loop_header_branch
      %21 = sbr.rel (%p19) target = $region8
    $region5: #{tpu_custom_call.1} parent=1 // loop_body
      %s23 = ssub.s32 %s18, 1
      %s24 = ssub.s32 %s18, 2
      %s31 = sadd.s32 1, %s26
      %p32 = scmp.ge.s32.totalorder %s31, 1
      %s33 = scalar_select %p32, 0, %s31
      %s34 = sadd.s32 1, %s25
      %s35 = scalar_select %p32, %s34, %s25
      %p36 = scmp.ge.s32.totalorder %s35, 2
      %s37 = scalar_select %p36, 0, %s35
      %s38 = ssub.s32 %s25, %s37
      %s39 = ssub.s32 %s26, %s33
      %s40 = sor.u32 %s38, %s39
      %p41 = scmp.eq.s32.totalorder %s40, 0
      %s43 = sadd.s32 %s42, 1
      %s44 = scalar_select %p41, %s42, %s43
      %p47 = pneg %p41
      %p48 = scmp.eq.s32.totalorder %s18, 1
      %p49 = por %p47, %p48
      %p50 = scmp.ne.s32.totalorder %s42, %s45
      %p51 = scmp.eq.s32.totalorder %s18, 0
      %p52 = por %p50, %p51
      %p53 = scmp.ne.s32.totalorder %s42, %s45
      %p54 = scmp.eq.s32.totalorder %s23, 1
      %p55 = por %p53, %p54
      %p56 = scmp.ne.s32.totalorder %s45, %s46
      %p57 = scmp.eq.s32.totalorder %s23, 0
      %p58 = por %p56, %p57
      %p59 = scmp.ne.s32.totalorder %s45, %s46
      %p60 = scmp.eq.s32.totalorder %s24, 1
      %p61 = por %p59, %p60
      %p63 = scmp.ne.s32.totalorder %s46, %s62
      %p64 = scmp.eq.s32.totalorder %s24, 0
      %p65 = por %p63, %p64
      %s66 = ssub.s32 %s25, %s37
      %p67 = scmp.eq.s32.totalorder %s66, 0
      %s69 = sadd.s32 %s68, 1
      %s70 = scalar_select %p67, %s68, %s69
      %p73 = pneg %p67
      %p74 = scmp.eq.s32.totalorder %s18, 1
      %p75 = por %p73, %p74
      %p76 = scmp.ne.s32.totalorder %s68, %s71
      %p77 = scmp.eq.s32.totalorder %s18, 0
      %p78 = por %p76, %p77
      %p79 = scmp.ne.s32.totalorder %s68, %s71
      %p80 = scmp.eq.s32.totalorder %s23, 1
      %p81 = por %p79, %p80
      %p82 = scmp.ne.s32.totalorder %s71, %s72
      %p83 = scmp.eq.s32.totalorder %s23, 0
      %p84 = por %p82, %p83
      %p85 = scmp.ne.s32.totalorder %s71, %s72
      %p86 = scmp.eq.s32.totalorder %s24, 1
      %p87 = por %p85, %p86
      %p89 = scmp.ne.s32.totalorder %s72, %s88
      %p90 = scmp.eq.s32.totalorder %s24, 0
      %p91 = por %p89, %p90
      %s93 = sadd.s32 %s92, 1
      %p96 = scmp.eq.s32.totalorder %s18, 1
      %p97 = scmp.ne.s32.totalorder %s92, %s94
      %p98 = scmp.eq.s32.totalorder %s18, 0
      %p99 = por %p97, %p98
      %p100 = scmp.ne.s32.totalorder %s92, %s94
      %p101 = scmp.eq.s32.totalorder %s23, 1
      %p102 = por %p100, %p101
      %p103 = scmp.ne.s32.totalorder %s94, %s95
      %p104 = scmp.eq.s32.totalorder %s23, 0
      %p105 = por %p103, %p104
      %p106 = scmp.ne.s32.totalorder %s94, %s95
      %p107 = scmp.eq.s32.totalorder %s24, 1
      %p108 = por %p106, %p107
      %p110 = scmp.ne.s32.totalorder %s95, %s109
      %p111 = scmp.eq.s32.totalorder %s24, 0
      %p112 = por %p110, %p111
      %s114 = sadd.s32 %s113, 1
      %p117 = scmp.eq.s32.totalorder %s18, 1
      %p118 = scmp.ne.s32.totalorder %s113, %s115
      %p119 = scmp.eq.s32.totalorder %s18, 0
      %p120 = por %p118, %p119
      %p121 = scmp.ne.s32.totalorder %s113, %s115
      %p122 = scmp.eq.s32.totalorder %s23, 1
      %p123 = por %p121, %p122
      %p124 = scmp.ne.s32.totalorder %s115, %s116
      %p125 = scmp.eq.s32.totalorder %s23, 0
      %p126 = por %p124, %p125
      %p127 = scmp.ne.s32.totalorder %s115, %s116
      %p128 = scmp.eq.s32.totalorder %s24, 1
      %p129 = por %p127, %p128
      %p131 = scmp.ne.s32.totalorder %s116, %s130
      %p132 = scmp.eq.s32.totalorder %s24, 0
      %p133 = por %p131, %p132
      %s135 = sadd.s32 %s134, 1
      %p138 = scmp.eq.s32.totalorder %s18, 1
      %p139 = scmp.ne.s32.totalorder %s134, %s136
      %p140 = scmp.eq.s32.totalorder %s18, 0
      %p141 = por %p139, %p140
      %p142 = scmp.ne.s32.totalorder %s134, %s136
      %p143 = scmp.eq.s32.totalorder %s23, 1
      %p144 = por %p142, %p143
      %p145 = scmp.ne.s32.totalorder %s136, %s137
      %p146 = scmp.eq.s32.totalorder %s23, 0
      %p147 = por %p145, %p146
      %p148 = scmp.ne.s32.totalorder %s136, %s137
      %p149 = scmp.eq.s32.totalorder %s24, 1
      %p150 = por %p148, %p149
      %p152 = scmp.ne.s32.totalorder %s137, %s151
      %p153 = scmp.eq.s32.totalorder %s24, 0
      %p154 = por %p152, %p153
      %s155 = ssub.s32 %s25, %s37
      %s156 = ssub.s32 %s26, %s33
      %s157 = sor.u32 %s155, %s156
      %p158 = scmp.eq.s32.totalorder %s157, 0
      %s160 = sadd.s32 %s159, 1
      %s161 = scalar_select %p158, %s159, %s160
      %p164 = pneg %p158
      %p165 = scmp.eq.s32.totalorder %s18, 1
      %p166 = por %p164, %p165
      %p167 = scmp.ne.s32.totalorder %s159, %s162
      %p168 = scmp.eq.s32.totalorder %s18, 0
      %p169 = por %p167, %p168
      %p170 = scmp.ne.s32.totalorder %s159, %s162
      %p171 = scmp.eq.s32.totalorder %s23, 1
      %p172 = por %p170, %p171
      %p173 = scmp.ne.s32.totalorder %s162, %s163
      %p174 = scmp.eq.s32.totalorder %s23, 0
      %p175 = por %p173, %p174
      %p176 = scmp.ne.s32.totalorder %s162, %s163
      %p177 = scmp.eq.s32.totalorder %s24, 1
      %p178 = por %p176, %p177
      %p180 = scmp.ne.s32.totalorder %s163, %s179
      %p181 = scmp.eq.s32.totalorder %s24, 0
      %p182 = por %p180, %p181
      %p183 = scmp.le.s32.totalorder 1, %s18
      %p184 = scmp.lt.s32.totalorder %s18, 3
      %p185 = pnand %p183, %p184
      %p186 = pneg %p185
      // Predicated region
      $region9: #{tpu_custom_call.1} parent=5 // pred_check
        _
      $region10: #{tpu_custom_call.1} parent=5 // pred_check_branch
        %188 = sbr.rel (%p185) target = $region12
      $region11: #{tpu_custom_call.1} parent=5 // pred_region
        %s189 = ssub.s32 %s18, 1
        // Predicated region
        $region13: #{tpu_custom_call.1} parent=11 // pred_check
          %p190 = pneg %p105
        $region14: #{tpu_custom_call.1} parent=11 // pred_check_branch
          %192 = sbr.rel (%p190) target = $region16
        $region15: #{tpu_custom_call.1} parent=11 // pred_region
          %194 = vsyncadd [#allocation6], 0
          %s195 = sshll.u32 %s2, 4
          %s196 = int_to_ptr.hbm [resolvable:$true] %s195
          %s197 = sshll.u32 [#allocation5], 4
          %s198 = int_to_ptr.vmem [resolvable:$true] %s197
          %203 = dma.hbm_to_vmem [thread:$0]  %s196, 512, %s198, [#allocation6], 128, 128, 8
        $region16: #{tpu_custom_call.1} parent=11 // pred_fallthru
          _
        // Predicated region
        $region17: #{tpu_custom_call.1} parent=11 // pred_check
          %p204 = pneg %p126
        $region18: #{tpu_custom_call.1} parent=11 // pred_check_branch
          %206 = sbr.rel (%p204) target = $region20
        $region19: #{tpu_custom_call.1} parent=11 // pred_region
          _
        $region20: #{tpu_custom_call.1} parent=11 // pred_fallthru
          _
        // Predicated region
        $region21: #{tpu_custom_call.1} parent=11 // pred_check
          %p207 = pneg %p147
        $region22: #{tpu_custom_call.1} parent=11 // pred_check_branch
          %209 = sbr.rel (%p207) target = $region24
        $region23: #{tpu_custom_call.1} parent=11 // pred_region
          _
        $region24: #{tpu_custom_call.1} parent=11 // pred_fallthru
          _
      $region12: #{tpu_custom_call.1} parent=5 // pred_fallthru
        _
      %p210 = scmp.lt.s32.totalorder %s18, 2
      // Predicated region
      $region25: #{tpu_custom_call.1} parent=5 // pred_check
        %p211 = pneg %p210
      $region26: #{tpu_custom_call.1} parent=5 // pred_check_branch
        %213 = sbr.rel (%p211) target = $region28
      $region27: #{tpu_custom_call.1} parent=5 // pred_region
        // Predicated region
        $region29: #{tpu_custom_call.1} parent=27 // pred_check
          %p214 = pneg %p52
        $region30: #{tpu_custom_call.1} parent=27 // pred_check_branch
          %216 = sbr.rel (%p214) target = $region32
        $region31: #{tpu_custom_call.1} parent=27 // pred_region
          %s217 = sand.u32 %s42, 1
          %s218 = scalar_lea.sflag [#allocation3], %s217
          %s219 = sand.u32 %s42, 1
          %s220 = smul.addr %s219, 16
          %s221 = scalar_lea.vmem [#allocation2], %s220
          %s222 = smul.u32 2, %s26
          %224 = vsyncadd %s218, 0
          %s225 = smul.addr %s25, 2
          %s226 = sadd.s32 %s222, %s225
          %s227 = smul.addr %s226, 8
          %s228 = scalar_lea.hbm %s0, %s227
          %s229 = sshll.u32 %s228, 4
          %s230 = int_to_ptr.hbm [resolvable:$true] %s229
          %s231 = sshll.u32 %s221, 4
          %s232 = int_to_ptr.vmem [resolvable:$true] %s231
          %237 = dma.hbm_to_vmem [thread:$0]  %s230, 256, %s232, %s218, 128, 128, 8
        $region32: #{tpu_custom_call.1} parent=27 // pred_fallthru
          _
        // Predicated region
        $region33: #{tpu_custom_call.1} parent=27 // pred_check
          %p238 = pneg %p78
        $region34: #{tpu_custom_call.1} parent=27 // pred_check_branch
          %240 = sbr.rel (%p238) target = $region36
        $region35: #{tpu_custom_call.1} parent=27 // pred_region
          %p241 = scmp.lt.s32.totalorder %s25, 1
          %s242 = scalar_select %p241, %s25, 1
          %s243 = smul.addr %s242, 8
          %s244 = scalar_lea.vmem %s1, %s243
        $region36: #{tpu_custom_call.1} parent=27 // pred_fallthru
          _
      $region28: #{tpu_custom_call.1} parent=5 // pred_fallthru
        _
      %p245 = scmp.le.s32.totalorder 1, %s18
      %p246 = scmp.lt.s32.totalorder %s18, 3
      %p247 = pnand %p245, %p246
      %p248 = pneg %p247
      // Predicated region
      $region37: #{tpu_custom_call.1} parent=5 // pred_check
        _
      $region38: #{tpu_custom_call.1} parent=5 // pred_check_branch
        %250 = sbr.rel (%p247) target = $region40
      $region39: #{tpu_custom_call.1} parent=5 // pred_region
        %s251 = ssub.s32 %s18, 1
        %s252 = sand.u32 %s45, 1
        %s253 = scalar_lea.sflag [#allocation3], %s252
        %s254 = sand.u32 %s45, 1
        %s255 = smul.addr %s254, 16
        %s256 = scalar_lea.vmem [#allocation2], %s255
        // Predicated region
        $region41: #{tpu_custom_call.1} parent=39 // pred_check
          %p257 = pneg %p58
        $region42: #{tpu_custom_call.1} parent=39 // pred_check_branch
          %259 = sbr.rel (%p257) target = $region44
        $region43: #{tpu_custom_call.1} parent=39 // pred_region
          %261 = dma.done %s253, 256
        $region44: #{tpu_custom_call.1} parent=39 // pred_fallthru
          _
        // Predicated region
        $region45: #{tpu_custom_call.1} parent=39 // pred_check
          %p262 = pneg %p105
        $region46: #{tpu_custom_call.1} parent=39 // pred_check_branch
          %264 = sbr.rel (%p262) target = $region48
        $region47: #{tpu_custom_call.1} parent=39 // pred_region
          %266 = dma.done [#allocation6], 512
        $region48: #{tpu_custom_call.1} parent=39 // pred_fallthru
          _
        %s267 = sand.u32 %s45, 1
        %s268 = scalar_lea.sflag [#allocation3], %s267
        %s269 = sand.u32 %s45, 1
        %s270 = smul.addr %s269, 16
        %s271 = scalar_lea.vmem [#allocation2], %s270
        %p272 = pneg %p58
        %p273 = pneg %p55
        %p274 = scmp.lt.s32.totalorder %s27, 1
        %s275 = scalar_select %p274, %s27, 1
        %s276 = smul.addr %s275, 8
        %s277 = scalar_lea.vmem %s1, %s276
        %p278 = pneg %p84
        %p279 = pneg %p81
        %p280 = pneg %p105
        %p281 = pneg %p102
        %p282 = pneg %p126
        %p283 = pneg %p123
        %p284 = pneg %p147
        %p285 = pneg %p144
        %p286 = pneg %p175
        %p287 = pneg %p172
        %s288 = sand.u32 %s162, 1
        %s289 = scalar_lea.sflag [#allocation4], %s288
        %s290 = sand.u32 %s162, 1
        %s291 = smul.addr %s290, 8
        %s292 = scalar_lea.vmem [#allocation7], %s291
        %s293 = smul.u32 2, %s28
        %p294 = scmp.lt.s32.totalorder %s27, 1
        %s295 = scalar_select %p294, %s27, 1
        %s296 = smul.addr %s295, 8
        %s297 = scalar_lea.vmem %s1, %s296
        %v298 = vld [vmem:[%s256] sm:$0xff]
        %v299 = vld [vmem:[%s256 + $0x8] sm:$0xff]
        %v300 = vld [vmem:[%s297] sm:$0xff]
        %v301 = vld [vmem:[#allocation5] sm:$0xff]
        %v302 = vld [vmem:[#allocation5 + $0x8] sm:$0xff]
        %v303 = vld [vmem:[#allocation5 + $0x10] sm:$0xff]
        %v304 = vld [vmem:[#allocation5 + $0x18] sm:$0xff]
        %vm305 = vcmask 261120
        %v307 = vsel %vm305, %v298, 0
        %v310 = vsel %vm305, %v299, 0
        %312 = vmatpush.msra.mxu0 0.0
        %313 = vmatpush.msra.mxu0 0.0
        %314 = vmatpush.msra.mxu0 0.0
        %315 = vmatpush.msra.mxu0 0.0
        %316 = vmatpush.msra.mxu0 0.0
        %317 = vmatpush.msra.mxu0 0.0
        %318 = vmatpush.msra.mxu0 0.0
        %319 = vmatpush.msra.mxu0 0.0
        %320 = vmatpush.msra.mxu0 0.0
        %321 = vmatpush.msra.mxu0 0.0
        %322 = vmatpush.msra.mxu0 0.0
        %323 = vmatpush.msra.mxu0 0.0
        %324 = vmatpush.msra.mxu0 %v304
        %325 = vmatpush.msra.mxu0 %v303
        %326 = vmatpush.msra.mxu0 %v302
        %327 = vmatpush.msra.mxu0 %v301
        %328 = vmatmul.f32.gmra.mxu0 %v307
        %v329 = vpop.f32.mrf.mxu0
        %v330 = vadd.f32 0.0, %v329
        %331 = vmatmul.f32.gmra.mxu0 %v310
        %v332 = vpop.f32.mrf.mxu0
        %v333 = vadd.f32 0.0, %v332
        %334 = vdwg.mxu0
        %v335 = vmul.f32 %v330, %v330
        %v336 = vmul.f32 %v333, %v333
        %v337 = vsel %vm305, %v335, 0.0
        %338 = vadd.xlane.f32.xlu0 %v337
        %v339 = vpop.xlane.xlu0 %338
        %v340 = vsel %vm305, %v336, 0.0
        %341 = vadd.xlane.f32.xlu0 %v340
        %v342 = vpop.xlane.xlu0 %341
        %v343 = vrsqrt.pop %v339
        %v344 = vmul.f32 %v343, %v339
        %v345 = vmul.f32 %v344, %v343
        %v346 = vmul.f32 0.5, %v345
        %v347 = vsub.f32 1.5, %v346
        %v348 = vmul.f32 %v343, %v347
        %vm349 = vweird.f32 %v339
        %vm350 = vweird.f32 %v343
        %vm351 = vmor %vm349, %vm350
        %v352 = vsel %vm351, %v343, %v348
        %v353 = vrsqrt.pop %v342
        %v354 = vmul.f32 %v353, %v342
        %v355 = vmul.f32 %v354, %v353
        %v356 = vmul.f32 0.5, %v355
        %v357 = vsub.f32 1.5, %v356
        %v358 = vmul.f32 %v353, %v357
        %vm359 = vweird.f32 %v342
        %vm360 = vweird.f32 %v353
        %vm361 = vmor %vm359, %vm360
        %v362 = vsel %vm361, %v353, %v358
        %v363 = vmul.f32 %v330, %v352
        %v364 = vmul.f32 %v333, %v362
        %v366 = vsel %vm305, %v300, 0
        %v369 = vsel %vm305, %v363, 0
        %v372 = vsel %vm305, %v364, 0
        %374 = vmatpush.xpose.msra.mxu0 0.0
        %375 = vmatpush.xpose.msra.mxu0 0.0
        %376 = vmatpush.xpose.msra.mxu0 0.0
        %377 = vmatpush.xpose.msra.mxu0 0.0
        %378 = vmatpush.xpose.msra.mxu0 0.0
        %379 = vmatpush.xpose.msra.mxu0 0.0
        %380 = vmatpush.xpose.msra.mxu0 0.0
        %381 = vmatpush.xpose.msra.mxu0 0.0
        %382 = vmatpush.xpose.msra.mxu0 0.0
        %383 = vmatpush.xpose.msra.mxu0 0.0
        %384 = vmatpush.xpose.msra.mxu0 0.0
        %385 = vmatpush.xpose.msra.mxu0 0.0
        %386 = vmatpush.xpose.msra.mxu0 0.0
        %387 = vmatpush.xpose.msra.mxu0 0.0
        %388 = vmatpush.xpose.msra.mxu0 %v372
        %389 = vmatpush.xpose.msra.mxu0 %v369
        %390 = vmatmul.f32.gmra.mxu0 %v366
        %v391 = vpop.f32.mrf.mxu0
        %v392 = vadd.f32 0.0, %v391
        %393 = vdwg.mxu0
        %vm394 = vcmask 130048
        %v395 = vsel %vm394, %v392, 0.0
        %v396 = vrot.slane %v395, 4
        %v397 = vadd.f32 %v395, %v396
        %v398 = vrot.slane %v397, 2
        %v399 = vadd.f32 %v397, %v398
        %v400 = vrot.slane %v399, 1
        %v401 = vadd.f32 %v399, %v400
        %v402 = vmul.f32 %v401, 0.125
        %v403 = vmul.f32 %v392, %v392
        %v404 = vsel %vm394, %v403, 0.0
        %v405 = vrot.slane %v404, 4
        %v406 = vadd.f32 %v404, %v405
        %v407 = vrot.slane %v406, 2
        %v408 = vadd.f32 %v406, %v407
        %v409 = vrot.slane %v408, 1
        %v410 = vadd.f32 %v408, %v409
        %v411 = vmul.f32 %v410, 0.125
        %v412 = vmul.f32 %v402, %v402
        %v413 = vsub.f32 %v411, %v412
        %v414 = vsub.f32 %v392, %v402
        %v415 = vadd.f32 %v413, 1e-05
        %v416 = vrsqrt.pop %v415
        %v417 = vmul.f32 %v416, %v415
        %v418 = vmul.f32 %v417, %v416
        %v419 = vmul.f32 0.5, %v418
        %v420 = vsub.f32 1.5, %v419
        %v421 = vmul.f32 %v416, %v420
        %vm422 = vweird.f32 %v415
        %vm423 = vweird.f32 %v416
        %vm424 = vmor %vm422, %vm423
        %v425 = vsel %vm424, %v416, %v421
        %v426 = vmul.f32 %v414, %v425
        %v427 = vld [vmem:[%s3] sm:$0xff]
        %429 = vset.pattern.permute.xlu0 0
        %430 = vperm.xlu0 %429, %v427
        %v431 = vpop.permute.xlu0 %430
        %v433 = vmul.f32 %v426, %v431
        %v434 = vld [vmem:[%s4] sm:$0xff]
        %436 = vset.pattern.permute.xlu0 0
        %437 = vperm.xlu0 %436, %v434
        %v438 = vpop.permute.xlu0 %437
        %v440 = vadd.f32 %v433, %v438
        %441 = vst.msk [vmem:[%s292] sm:$0xff] %vm394, %v440
        %s442 = sand.u32 %s162, 1
        %s443 = scalar_lea.sflag [#allocation4], %s442
        %s444 = sand.u32 %s162, 1
        %s445 = smul.addr %s444, 8
        %s446 = scalar_lea.vmem [#allocation7], %s445
        // Predicated region
        $region49: #{tpu_custom_call.1} parent=39 // pred_check
          %p447 = pneg %p172
        $region50: #{tpu_custom_call.1} parent=39 // pred_check_branch
          %449 = sbr.rel (%p447) target = $region52
        $region51: #{tpu_custom_call.1} parent=39 // pred_region
          %451 = vsyncadd %s443, 0
          %s452 = sadd.s32 %s28, %s27
          %s453 = smul.addr %s452, 8
          %s454 = scalar_lea.hbm %s5, %s453
          %s456 = sshll.u32 %s446, 4
          %s457 = int_to_ptr.vmem [resolvable:$true] %s456
          %s458 = sshll.u32 %s454, 4
          %s459 = int_to_ptr.hbm [resolvable:$true] %s458
          %461 = dma.vmem_to_hbm [thread:$0]  %s457, 128, %s459, %s443
        $region52: #{tpu_custom_call.1} parent=39 // pred_fallthru
          _
      $region40: #{tpu_custom_call.1} parent=5 // pred_fallthru
        _
      %p462 = scmp.le.s32.totalorder 2, %s18
      // Predicated region
      $region53: #{tpu_custom_call.1} parent=5 // pred_check
        %p463 = pneg %p462
      $region54: #{tpu_custom_call.1} parent=5 // pred_check_branch
        %465 = sbr.rel (%p463) target = $region56
      $region55: #{tpu_custom_call.1} parent=5 // pred_region
        %s466 = ssub.s32 %s18, 2
        // Predicated region
        $region57: #{tpu_custom_call.1} parent=55 // pred_check
          %p467 = pneg %p178
        $region58: #{tpu_custom_call.1} parent=55 // pred_check_branch
          %469 = sbr.rel (%p467) target = $region60
        $region59: #{tpu_custom_call.1} parent=55 // pred_region
          %s470 = sand.u32 %s163, 1
          %s471 = scalar_lea.sflag [#allocation4], %s470
          %s472 = sand.u32 %s163, 1
          %s473 = smul.addr %s472, 8
          %s474 = scalar_lea.vmem [#allocation7], %s473
          %476 = dma.done %s471, 128
        $region60: #{tpu_custom_call.1} parent=55 // pred_fallthru
          _
      $region56: #{tpu_custom_call.1} parent=5 // pred_fallthru
        _
    $region6: #{tpu_custom_call.1} parent=1 // loop_footer
      %s22 = sadd.s32 1, %s18
    $region7: #{tpu_custom_call.1} parent=1 // loop_footer_branch
      %17 = sbr.rel target = $region3
    $region8: #{tpu_custom_call.1} parent=1 // loop_exit
      _
    %477 = vsyncpa [#allocation3], 1
    %s478 = scalar_lea.sflag [#allocation3], 1
    %479 = vsyncpa %s478, 1
    %480 = vsyncpa [#allocation6], 1
    %481 = vsyncpa [#allocation4], 1
    %s482 = scalar_lea.sflag [#allocation4], 1
    %483 = vsyncpa %s482, 1

</llo_original>
